<compile_context>
chip_gen: v5e
topology: v5e:2x2
jax: 0.10.0
libtpu: 0.0.40
codegen_flags: <defaults>
</compile_context>

<pallas_src>
import functools

import jax
import jax.numpy as jnp
from jax.experimental import pallas as pl
from jax.experimental.pallas import tpu as pltpu

LANE = 128
MAX_TILE_B = 512  # f32 tiles: 512*(64+128)*4 ~ 0.4 MiB per step; safe on 64 MiB v7x VMEM


def _round_up(n, m):
    return ((n + m - 1) // m) * m


def _pad_to(a, shape):
    return jnp.pad(a, [(0, t - s) for s, t in zip(a.shape, shape)])


def mlp_logsoftmax_kernel(x_ref, w0_ref, b0_ref, w1_ref, b1_ref,
                          w2_ref, b2_ref, o_ref, *, num_classes):
    # fc0 + ReLU  (MXU matmul, f32 accumulate; bias (1, H0) broadcasts over rows)
    h0 = jnp.dot(x_ref[...], w0_ref[...], preferred_element_type=jnp.float32)
    h0 = jnp.maximum(h0 + b0_ref[...], 0.0)

    # fc1 + ReLU
    h1 = jnp.dot(h0, w1_ref[...], preferred_element_type=jnp.float32)
    h1 = jnp.maximum(h1 + b1_ref[...], 0.0)

    # fc2 (logits, lane-padded to 128)
    z = jnp.dot(h1, w2_ref[...], preferred_element_type=jnp.float32)
    z = z + b2_ref[...]

    # mask padded class lanes so they do not perturb the log_softmax reduction
    lane_idx = jax.lax.broadcasted_iota(jnp.int32, z.shape, dimension=1)
    z = jnp.where(lane_idx < num_classes, z, jnp.float32(-1e30))

    # numerically stable log_softmax along dim=1 (exp/log run on the EUP slot)
    z_max = jnp.max(z, axis=-1, keepdims=True)
    shifted = z - z_max
    lse = jnp.log(jnp.sum(jnp.exp(shifted), axis=-1, keepdims=True))
    o_ref[...] = (shifted - lse).astype(o_ref.dtype)


def _pad_params_for_kernel(params):
    """Zero-pad feature dims to LANE multiples; biases reshaped to (1, out)."""
    w0, b0, w1, b1, w2, b2 = params
    d_in = w0.shape[0]
    h0p = _round_up(w0.shape[1], LANE)   # 100 -> 128
    h1p = _round_up(w1.shape[1], LANE)   # 50  -> 128
    ncp = _round_up(w2.shape[1], LANE)   # 10  -> 128
    w0p = _pad_to(w0, (d_in, h0p))
    b0p = _pad_to(b0.reshape(1, -1), (1, h0p))
    w1p = _pad_to(w1, (h0p, h1p))
    b1p = _pad_to(b1.reshape(1, -1), (1, h1p))
    w2p = _pad_to(w2, (h1p, ncp))
    b2p = _pad_to(b2.reshape(1, -1), (1, ncp))
    return w0p, b0p, w1p, b1p, w2p, b2p


def model_b_forward(x, params):
    """x: any shape whose trailing dims flatten to input_size (like .view)."""
    w0, _, _, _, w2, _ = params
    input_size = w0.shape[0]
    num_classes = w2.shape[1]

    w0p, b0p, w1p, b1p, w2p, b2p = _pad_params_for_kernel(params)
    h0p, h1p, ncp = w0p.shape[1], w1p.shape[1], w2p.shape[1]

    x2d = x.reshape(-1, input_size).astype(jnp.float32)
    batch = x2d.shape[0]

    # Batch tiling: multiple of 8 sublanes, capped so tiles stay tiny in VMEM.
    tile_b = min(MAX_TILE_B, _round_up(batch, 8))
    padded_batch = _round_up(batch, tile_b)
    if padded_batch != batch:
        x2d = jnp.pad(x2d, ((0, padded_batch - batch), (0, 0)))
    nb = padded_batch // tile_b

    kernel = functools.partial(mlp_logsoftmax_kernel, num_classes=num_classes)

    def const_spec(shape):
        # weights/biases stay resident: same block every grid step
        return pl.BlockSpec(shape, lambda i: (0,) * len(shape))

    param_bytes = 4 * sum(a.size for a in (w0p, b0p, w1p, b1p, w2p, b2p))
    cost = pl.CostEstimate(
        flops=2 * padded_batch * (input_size * h0p + h0p * h1p + h1p * ncp),
        transcendentals=padded_batch * (ncp + 1),
        bytes_accessed=4 * padded_batch * (input_size + ncp) + param_bytes,
    )

    out = pl.pallas_call(
        kernel,
        out_shape=jax.ShapeDtypeStruct((padded_batch, ncp), jnp.float32),
        grid=(nb,),
        in_specs=[
            pl.BlockSpec((tile_b, input_size), lambda i: (i, 0)),
            const_spec(w0p.shape), const_spec(b0p.shape),
            const_spec(w1p.shape), const_spec(b1p.shape),
            const_spec(w2p.shape), const_spec(b2p.shape),
        ],
        out_specs=pl.BlockSpec((tile_b, ncp), lambda i: (i, 0)),
        compiler_params=pltpu.CompilerParams(
            dimension_semantics=("parallel",)),
        cost_estimate=cost,
    )(x2d, w0p, b0p, w1p, b1p, w2p, b2p)

    # strip batch padding and the lane padding on the class dim
    return out[:batch, :num_classes]


def init_params(input_size, key):
    """Deterministic init mirroring nn.Linear shapes (stored as (in, out))."""
    dims = [(input_size, 100), (100, 50), (50, 10)]
    params = []
    for i, (d_in, d_out) in enumerate(dims):
        kw, kb = jax.random.split(jax.random.fold_in(key, i))
        bound = 1.0 / (d_in ** 0.5)  # PyTorch Linear default uniform bound
        w = jax.random.uniform(kw, (d_in, d_out), jnp.float32, -bound, bound)
        b = jax.random.uniform(kb, (d_out,), jnp.float32, -bound, bound)
        params += [w, b]
    return tuple(params)


# TODO(synk): the Adam optimizer held by the PyTorch module is training state,
# not part of the forward pass, so it is not translated.

if __name__ == "__main__":
    input_size = 64   # flattened 8x8 "image"
    batch = 8

    key = jax.random.PRNGKey(0)
    k_x, k_p = jax.random.split(key)
    x = jax.random.normal(k_x, (batch, 8, 8), jnp.float32)  # flattened in forward
    params = init_params(input_size, k_p)

    out = model_b_forward(x, params)
    out = jax.block_until_ready(out)

    # reference check against plain JAX
    w0, b0, w1, b1, w2, b2 = params
    x2d = x.reshape(-1, input_size)
    h = jnp.maximum(x2d @ w0 + b0, 0.0)
    h = jnp.maximum(h @ w1 + b1, 0.0)
    z = h @ w2 + b2
    ref = jax.nn.log_softmax(z, axis=-1)

    row_sums = jnp.sum(jnp.exp(out), axis=1)
    assert out.shape == (batch, 10)
    assert bool(jnp.all(jnp.abs(row_sums - 1.0) < 1e-4))
    assert bool(jnp.max(jnp.abs(out - ref)) < 1e-4)
    print("KERNEL_OK")
</pallas_src>

<mosaic_0001>
module attributes {stable_mosaic.version = 11 : i64} {
  func.func @mlp_logsoftmax_kernel(%arg0: i32, %arg1: memref<8x64xf32, #tpu.memory_space<vmem>>, %arg2: memref<64x128xf32, #tpu.memory_space<vmem>>, %arg3: memref<1x128xf32, #tpu.memory_space<vmem>>, %arg4: memref<128x128xf32, #tpu.memory_space<vmem>>, %arg5: memref<1x128xf32, #tpu.memory_space<vmem>>, %arg6: memref<128x128xf32, #tpu.memory_space<vmem>>, %arg7: memref<1x128xf32, #tpu.memory_space<vmem>>, %arg8: memref<8x128xf32, #tpu.memory_space<vmem>>) attributes {dimension_semantics = [#tpu.dimension_semantics<parallel>], iteration_bounds = array<i64: 1>, scalar_prefetch = 0 : i64, scratch_operands = 0 : i64, tpu.core_type = #tpu.core_type<tc>, window_params = [{transform_indices = @transform_0, window_bounds = array<i64: 8, 64>}, {pipeline_mode = #tpu.pipeline_mode<synchronous>, transform_indices = @transform_1, window_bounds = array<i64: 64, 128>}, {pipeline_mode = #tpu.pipeline_mode<synchronous>, transform_indices = @transform_2, window_bounds = array<i64: 1, 128>}, {pipeline_mode = #tpu.pipeline_mode<synchronous>, transform_indices = @transform_3, window_bounds = array<i64: 128, 128>}, {pipeline_mode = #tpu.pipeline_mode<synchronous>, transform_indices = @transform_4, window_bounds = array<i64: 1, 128>}, {pipeline_mode = #tpu.pipeline_mode<synchronous>, transform_indices = @transform_5, window_bounds = array<i64: 128, 128>}, {pipeline_mode = #tpu.pipeline_mode<synchronous>, transform_indices = @transform_6, window_bounds = array<i64: 1, 128>}, {transform_indices = @transform_7, window_bounds = array<i64: 8, 128>}]} {
    %c0 = arith.constant 0 : index
    %c0_0 = arith.constant 0 : index
    %0 = vector.load %arg1[%c0, %c0_0] : memref<8x64xf32, #tpu.memory_space<vmem>>, vector<8x64xf32>
    %c0_1 = arith.constant 0 : index
    %c0_2 = arith.constant 0 : index
    %1 = vector.load %arg2[%c0_1, %c0_2] : memref<64x128xf32, #tpu.memory_space<vmem>>, vector<64x128xf32>
    %cst = arith.constant dense<0.000000e+00> : vector<8x128xf32>
    %2 = tpu.matmul %0, %1, %cst {dimension_numbers = #tpu.dot_dimension_numbers<[1], [0], [0], [1], [0, 0, 1, 1], [], []>} : vector<8x64xf32>, vector<64x128xf32>, vector<8x128xf32> -> vector<8x128xf32>
    %c0_3 = arith.constant 0 : index
    %c0_4 = arith.constant 0 : index
    %3 = vector.load %arg3[%c0_3, %c0_4] : memref<1x128xf32, #tpu.memory_space<vmem>>, vector<1x128xf32>
    %4 = vector.broadcast %3 : vector<1x128xf32> to vector<8x128xf32>
    %5 = arith.addf %2, %4 : vector<8x128xf32>
    %cst_5 = arith.constant 0.000000e+00 : f32
    %6 = vector.broadcast %cst_5 : f32 to vector<8x128xf32>
    %7 = arith.maximumf %5, %6 : vector<8x128xf32>
    %c0_6 = arith.constant 0 : index
    %c0_7 = arith.constant 0 : index
    %8 = vector.load %arg4[%c0_6, %c0_7] : memref<128x128xf32, #tpu.memory_space<vmem>>, vector<128x128xf32>
    %cst_8 = arith.constant dense<0.000000e+00> : vector<8x128xf32>
    %9 = tpu.matmul %7, %8, %cst_8 {dimension_numbers = #tpu.dot_dimension_numbers<[1], [0], [0], [1], [0, 0, 1, 1], [], []>} : vector<8x128xf32>, vector<128x128xf32>, vector<8x128xf32> -> vector<8x128xf32>
    %c0_9 = arith.constant 0 : index
    %c0_10 = arith.constant 0 : index
    %10 = vector.load %arg5[%c0_9, %c0_10] : memref<1x128xf32, #tpu.memory_space<vmem>>, vector<1x128xf32>
    %11 = vector.broadcast %10 : vector<1x128xf32> to vector<8x128xf32>
    %12 = arith.addf %9, %11 : vector<8x128xf32>
    %cst_11 = arith.constant 0.000000e+00 : f32
    %13 = vector.broadcast %cst_11 : f32 to vector<8x128xf32>
    %14 = arith.maximumf %12, %13 : vector<8x128xf32>
    %c0_12 = arith.constant 0 : index
    %c0_13 = arith.constant 0 : index
    %15 = vector.load %arg6[%c0_12, %c0_13] : memref<128x128xf32, #tpu.memory_space<vmem>>, vector<128x128xf32>
    %cst_14 = arith.constant dense<0.000000e+00> : vector<8x128xf32>
    %16 = tpu.matmul %14, %15, %cst_14 {dimension_numbers = #tpu.dot_dimension_numbers<[1], [0], [0], [1], [0, 0, 1, 1], [], []>} : vector<8x128xf32>, vector<128x128xf32>, vector<8x128xf32> -> vector<8x128xf32>
    %c0_15 = arith.constant 0 : index
    %c0_16 = arith.constant 0 : index
    %17 = vector.load %arg7[%c0_15, %c0_16] : memref<1x128xf32, #tpu.memory_space<vmem>>, vector<1x128xf32>
    %18 = vector.broadcast %17 : vector<1x128xf32> to vector<8x128xf32>
    %19 = arith.addf %16, %18 : vector<8x128xf32>
    %20 = tpu.iota {dimensions = array<i32: 1>} : vector<8x128xi32>
    %c10_i32 = arith.constant 10 : i32
    %21 = vector.broadcast %c10_i32 : i32 to vector<8x128xi32>
    %22 = arith.cmpi slt, %20, %21 : vector<8x128xi32>
    %cst_17 = arith.constant -1.000000e+30 : f32
    %23 = vector.broadcast %cst_17 : f32 to vector<8x128xf32>
    %24 = arith.select %22, %19, %23 : vector<8x128xi1>, vector<8x128xf32>
    %cst_18 = arith.constant dense<0xFF800000> : vector<8xf32>
    %25 = vector.multi_reduction <maximumf>, %24, %cst_18 [1] : vector<8x128xf32> to vector<8xf32>
    %26 = vector.shape_cast %25 : vector<8xf32> to vector<8x1xf32>
    %27 = vector.broadcast %26 : vector<8x1xf32> to vector<8x128xf32>
    %28 = arith.subf %24, %27 : vector<8x128xf32>
    %29 = math.exp %28 : vector<8x128xf32>
    %cst_19 = arith.constant dense<0.000000e+00> : vector<8xf32>
    %30 = vector.multi_reduction <add>, %29, %cst_19 [1] : vector<8x128xf32> to vector<8xf32>
    %31 = vector.shape_cast %30 : vector<8xf32> to vector<8x1xf32>
    %32 = math.log %31 : vector<8x1xf32>
    %33 = vector.broadcast %32 : vector<8x1xf32> to vector<8x128xf32>
    %34 = arith.subf %28, %33 : vector<8x128xf32>
    %c0_20 = arith.constant 0 : index
    %c0_21 = arith.constant 0 : index
    %35 = vector.load %arg8[%c0_20, %c0_21] : memref<8x128xf32, #tpu.memory_space<vmem>>, vector<8x128xf32>
    tpu.vector_store %arg8[%c0_20, %c0_21], %34 {strides = array<i32>} : memref<8x128xf32, #tpu.memory_space<vmem>>, vector<8x128xf32>,
    return
  }
  func.func @transform_0(%arg0: i32) -> (i32, i32) {
    %c0_i32 = arith.constant 0 : i32
    %c0_i32_0 = arith.constant 0 : i32
    return %arg0, %c0_i32 : i32, i32
  }
  func.func @transform_1(%arg0: i32) -> (i32, i32) {
    %c0_i32 = arith.constant 0 : i32
    %c0_i32_0 = arith.constant 0 : i32
    %c0_i32_1 = arith.constant 0 : i32
    return %c0_i32, %c0_i32_0 : i32, i32
  }
  func.func @transform_2(%arg0: i32) -> (i32, i32) {
    %c0_i32 = arith.constant 0 : i32
    %c0_i32_0 = arith.constant 0 : i32
    %c0_i32_1 = arith.constant 0 : i32
    return %c0_i32, %c0_i32_0 : i32, i32
  }
  func.func @transform_3(%arg0: i32) -> (i32, i32) {
    %c0_i32 = arith.constant 0 : i32
    %c0_i32_0 = arith.constant 0 : i32
    %c0_i32_1 = arith.constant 0 : i32
    return %c0_i32, %c0_i32_0 : i32, i32
  }
  func.func @transform_4(%arg0: i32) -> (i32, i32) {
    %c0_i32 = arith.constant 0 : i32
    %c0_i32_0 = arith.constant 0 : i32
    %c0_i32_1 = arith.constant 0 : i32
    return %c0_i32, %c0_i32_0 : i32, i32
  }
  func.func @transform_5(%arg0: i32) -> (i32, i32) {
    %c0_i32 = arith.constant 0 : i32
    %c0_i32_0 = arith.constant 0 : i32
    %c0_i32_1 = arith.constant 0 : i32
    return %c0_i32, %c0_i32_0 : i32, i32
  }
  func.func @transform_6(%arg0: i32) -> (i32, i32) {
    %c0_i32 = arith.constant 0 : i32
    %c0_i32_0 = arith.constant 0 : i32
    %c0_i32_1 = arith.constant 0 : i32
    return %c0_i32, %c0_i32_0 : i32, i32
  }
  func.func @transform_7(%arg0: i32) -> (i32, i32) {
    %c0_i32 = arith.constant 0 : i32
    %c0_i32_0 = arith.constant 0 : i32
    return %arg0, %c0_i32 : i32, i32
  }
}

</mosaic_0001>

<llo_original>
// kernel: tpu_custom_call.1
$region0: #{tpu_custom_call.1}
  #allocation0 [shape = 'u32[]', space=smem, size = 0x4, offset = 0x4, fixed_abs, tag = 'smem constant byte address 0x4 - core index']
  #allocation1 [shape = 'u32[72,128]{1,0:T(1,128)}', space=vmem, size = 0x9000, scoped, tag = 'internal scratch']
  %s0 = inlined_call_operand.hbm [shape: f32[8,64], index: 0, kind: input, shape index: {}]
  %s1 = inlined_call_operand.hbm [shape: f32[64,128], index: 1, kind: input, shape index: {}]
  %s2 = inlined_call_operand.vmem [shape: f32[1,128], index: 2, kind: input, shape index: {}]
  %s3 = inlined_call_operand.hbm [shape: f32[128,128], index: 3, kind: input, shape index: {}]
  %s4 = inlined_call_operand.vmem [shape: f32[1,128], index: 4, kind: input, shape index: {}]
  %s5 = inlined_call_operand.hbm [shape: f32[128,128], index: 5, kind: input, shape index: {}]
  %s6 = inlined_call_operand.vmem [shape: f32[1,128], index: 6, kind: input, shape index: {}]
  %s7 = inlined_call_operand.hbm [shape: f32[8,128], index: 7, kind: output, shape index: {}]
  %s8 = sld [smem:[#allocation0]]
  $region54: #{tpu_custom_call.1} parent=0
    _
  %s10 = ssub.s32 1, %s8
  %s11 = scalar_select 0, %s10, %s8
  $region1: #{tpu_custom_call.1} parent=0
    #allocation2 [shape = 'u8[4096]{0}', space=vmem, size = 0x1000, scoped, tag = 'input window, operand 0, single buffered']
    #allocation3 [shape = 's32[1]{0}', space=sflag, size = 0x4, scoped, tag = 'scoped memory for tpu_custom_call.1']
    #allocation4 [shape = 's32[1]{0}', space=sflag, size = 0x4, scoped, tag = 'scoped memory for tpu_custom_call.1']
    #allocation5 [shape = 'u8[32768]{0}', space=vmem, size = 0x8000, scoped, tag = 'input window, operand 1, single buffered']
    #allocation6 [shape = 's32[1]{0}', space=sflag, size = 0x4, scoped, tag = 'scoped memory for tpu_custom_call.1']
    #allocation7 [shape = 'u8[65536]{0}', space=vmem, size = 0x10000, scoped, tag = 'input window, operand 3, single buffered']
    #allocation8 [shape = 'u8[65536]{0}', space=vmem, size = 0x10000, scoped, tag = 'input window, operand 5, single buffered']
    #allocation9 [shape = 's32[1]{0}', space=sflag, size = 0x4, scoped, tag = 'scoped memory for tpu_custom_call.1']
    #allocation10 [shape = 'u8[4096]{0}', space=vmem, size = 0x1000, scoped, tag = 'output window, operand 0, single buffered']
    %12 = vsyncpa [#allocation3], 0
    %13 = vsyncpa [#allocation6], 0
    %14 = vsyncpa [#allocation9], 0
    %15 = vsyncpa [#allocation4], 0
    // Predicated region
    $region2: #{tpu_custom_call.1} parent=1 // pred_check
      _
    $region3: #{tpu_custom_call.1} parent=1 // pred_check_branch
      %17 = sbr.rel (0) target = $region5
    $region4: #{tpu_custom_call.1} parent=1 // pred_region
      %19 = vsyncadd [#allocation3], 0
      %s21 = sshll.u32 %s0, 4
      %s22 = int_to_ptr.hbm [resolvable:$true] %s21
      %s23 = sshll.u32 [#allocation2], 4
      %s24 = int_to_ptr.vmem [resolvable:$true] %s23
      %26 = dma.hbm_to_vmem [thread:$0]  %s22, 128, %s24, [#allocation3]
    $region5: #{tpu_custom_call.1} parent=1 // pred_fallthru
      _
    // Predicated region
    $region6: #{tpu_custom_call.1} parent=1 // pred_check
      _
    $region7: #{tpu_custom_call.1} parent=1 // pred_check_branch
      %28 = sbr.rel (0) target = $region9
    $region8: #{tpu_custom_call.1} parent=1 // pred_region
      %30 = vsyncadd [#allocation6], 0
      %s31 = sshll.u32 %s1, 4
      %s32 = int_to_ptr.hbm [resolvable:$true] %s31
      %s33 = sshll.u32 [#allocation5], 4
      %s34 = int_to_ptr.vmem [resolvable:$true] %s33
      %39 = dma.hbm_to_vmem [thread:$0]  %s32, 1024, %s34, [#allocation6], 128, 128, 8
    $region9: #{tpu_custom_call.1} parent=1 // pred_fallthru
      _
    // Predicated region
    $region10: #{tpu_custom_call.1} parent=1 // pred_check
      _
    $region11: #{tpu_custom_call.1} parent=1 // pred_check_branch
      %41 = sbr.rel (0) target = $region13
    $region12: #{tpu_custom_call.1} parent=1 // pred_region
      _
    $region13: #{tpu_custom_call.1} parent=1 // pred_fallthru
      _
    // Predicated region
    $region14: #{tpu_custom_call.1} parent=1 // pred_check
      _
    $region15: #{tpu_custom_call.1} parent=1 // pred_check_branch
      %43 = sbr.rel (0) target = $region17
    $region16: #{tpu_custom_call.1} parent=1 // pred_region
      %45 = vsyncadd [#allocation6], 0
      %s46 = sshll.u32 %s3, 4
      %s47 = int_to_ptr.hbm [resolvable:$true] %s46
      %s48 = sshll.u32 [#allocation7], 4
      %s49 = int_to_ptr.vmem [resolvable:$true] %s48
      %54 = dma.hbm_to_vmem [thread:$0]  %s47, 2048, %s49, [#allocation6], 128, 128, 8
    $region17: #{tpu_custom_call.1} parent=1 // pred_fallthru
      _
    // Predicated region
    $region18: #{tpu_custom_call.1} parent=1 // pred_check
      _
    $region19: #{tpu_custom_call.1} parent=1 // pred_check_branch
      %56 = sbr.rel (0) target = $region21
    $region20: #{tpu_custom_call.1} parent=1 // pred_region
      _
    $region21: #{tpu_custom_call.1} parent=1 // pred_fallthru
      _
    // Predicated region
    $region22: #{tpu_custom_call.1} parent=1 // pred_check
      _
    $region23: #{tpu_custom_call.1} parent=1 // pred_check_branch
      %58 = sbr.rel (0) target = $region25
    $region24: #{tpu_custom_call.1} parent=1 // pred_region
      %60 = vsyncadd [#allocation9], 0
      %s61 = sshll.u32 %s5, 4
      %s62 = int_to_ptr.hbm [resolvable:$true] %s61
      %s63 = sshll.u32 [#allocation8], 4
      %s64 = int_to_ptr.vmem [resolvable:$true] %s63
      %69 = dma.hbm_to_vmem [thread:$0]  %s62, 2048, %s64, [#allocation9], 128, 128, 8
    $region25: #{tpu_custom_call.1} parent=1 // pred_fallthru
      _
    // Predicated region
    $region26: #{tpu_custom_call.1} parent=1 // pred_check
      _
    $region27: #{tpu_custom_call.1} parent=1 // pred_check_branch
      %71 = sbr.rel (0) target = $region29
    $region28: #{tpu_custom_call.1} parent=1 // pred_region
      _
    $region29: #{tpu_custom_call.1} parent=1 // pred_fallthru
      _
    // Predicated region
    $region30: #{tpu_custom_call.1} parent=1 // pred_check
      _
    $region31: #{tpu_custom_call.1} parent=1 // pred_check_branch
      %73 = sbr.rel (0) target = $region33
    $region32: #{tpu_custom_call.1} parent=1 // pred_region
      %75 = dma.done [#allocation3], 128
    $region33: #{tpu_custom_call.1} parent=1 // pred_fallthru
      _
    // Predicated region
    $region34: #{tpu_custom_call.1} parent=1 // pred_check
      _
    $region35: #{tpu_custom_call.1} parent=1 // pred_check_branch
      %77 = sbr.rel (0) target = $region37
    $region36: #{tpu_custom_call.1} parent=1 // pred_region
      %79 = dma.done [#allocation6], 1024
    $region37: #{tpu_custom_call.1} parent=1 // pred_fallthru
      _
    // Predicated region
    $region38: #{tpu_custom_call.1} parent=1 // pred_check
      _
    $region39: #{tpu_custom_call.1} parent=1 // pred_check_branch
      %81 = sbr.rel (0) target = $region41
    $region40: #{tpu_custom_call.1} parent=1 // pred_region
      %83 = dma.done [#allocation6], 2048
    $region41: #{tpu_custom_call.1} parent=1 // pred_fallthru
      _
    // Predicated region
    $region42: #{tpu_custom_call.1} parent=1 // pred_check
      _
    $region43: #{tpu_custom_call.1} parent=1 // pred_check_branch
      %85 = sbr.rel (0) target = $region45
    $region44: #{tpu_custom_call.1} parent=1 // pred_region
      %87 = dma.done [#allocation9], 2048
    $region45: #{tpu_custom_call.1} parent=1 // pred_fallthru
      _
    %v88 = vld [vmem:[#allocation2] sm:$0xff]
    %v89 = vld [vmem:[#allocation5] sm:$0xff]
    %v90 = vld [vmem:[#allocation5 + $0x8] sm:$0xff]
    %v91 = vld [vmem:[#allocation5 + $0x10] sm:$0xff]
    %v92 = vld [vmem:[#allocation5 + $0x18] sm:$0xff]
    %v93 = vld [vmem:[#allocation5 + $0x20] sm:$0xff]
    %v94 = vld [vmem:[#allocation5 + $0x28] sm:$0xff]
    %v95 = vld [vmem:[#allocation5 + $0x30] sm:$0xff]
    %v96 = vld [vmem:[#allocation5 + $0x38] sm:$0xff]
    %v97 = vld [vmem:[%s2] sm:$0x1]
    %v99 = vperm.slane %v97, 0
    %vm101 = vcmask 523264
    %v103 = vsel %vm101, %v88, 0
    %105 = vmatpush.msra.mxu0 0.0
    %106 = vmatpush.msra.mxu0 0.0
    %107 = vmatpush.msra.mxu0 0.0
    %108 = vmatpush.msra.mxu0 0.0
    %109 = vmatpush.msra.mxu0 0.0
    %110 = vmatpush.msra.mxu0 0.0
    %111 = vmatpush.msra.mxu0 0.0
    %112 = vmatpush.msra.mxu0 0.0
    %113 = vmatpush.msra.mxu0 %v96
    %114 = vmatpush.msra.mxu0 %v95
    %115 = vmatpush.msra.mxu0 %v94
    %116 = vmatpush.msra.mxu0 %v93
    %117 = vmatpush.msra.mxu0 %v92
    %118 = vmatpush.msra.mxu0 %v91
    %119 = vmatpush.msra.mxu0 %v90
    %120 = vmatpush.msra.mxu0 %v89
    %121 = vmatmul.f32.gmra.mxu0 %v103
    %v122 = vpop.f32.mrf.mxu0
    %v123 = vadd.f32 %v99, %v122
    %124 = vdwg.mxu0
    %v125 = vmax.f32 %v123, 0.0
    %v126 = vld [vmem:[#allocation7] sm:$0xff]
    %v127 = vld [vmem:[#allocation7 + $0x8] sm:$0xff]
    %v128 = vld [vmem:[#allocation7 + $0x10] sm:$0xff]
    %v129 = vld [vmem:[#allocation7 + $0x18] sm:$0xff]
    %v130 = vld [vmem:[#allocation7 + $0x20] sm:$0xff]
    %v131 = vld [vmem:[#allocation7 + $0x28] sm:$0xff]
    %v132 = vld [vmem:[#allocation7 + $0x30] sm:$0xff]
    %v133 = vld [vmem:[#allocation7 + $0x38] sm:$0xff]
    %v134 = vld [vmem:[#allocation7 + $0x40] sm:$0xff]
    %v135 = vld [vmem:[#allocation7 + $0x48] sm:$0xff]
    %v136 = vld [vmem:[#allocation7 + $0x50] sm:$0xff]
    %v137 = vld [vmem:[#allocation7 + $0x58] sm:$0xff]
    %v138 = vld [vmem:[#allocation7 + $0x60] sm:$0xff]
    %v139 = vld [vmem:[#allocation7 + $0x68] sm:$0xff]
    %v140 = vld [vmem:[#allocation7 + $0x70] sm:$0xff]
    %v141 = vld [vmem:[#allocation7 + $0x78] sm:$0xff]
    %v142 = vld [vmem:[%s4] sm:$0x1]
    %v144 = vperm.slane %v142, 0
    %146 = vmatpush.msra.mxu0 %v141
    %147 = vmatpush.msra.mxu0 %v140
    %148 = vmatpush.msra.mxu0 %v139
    %149 = vmatpush.msra.mxu0 %v138
    %150 = vmatpush.msra.mxu0 %v137
    %151 = vmatpush.msra.mxu0 %v136
    %152 = vmatpush.msra.mxu0 %v135
    %153 = vmatpush.msra.mxu0 %v134
    %154 = vmatpush.msra.mxu0 %v133
    %155 = vmatpush.msra.mxu0 %v132
    %156 = vmatpush.msra.mxu0 %v131
    %157 = vmatpush.msra.mxu0 %v130
    %158 = vmatpush.msra.mxu0 %v129
    %159 = vmatpush.msra.mxu0 %v128
    %160 = vmatpush.msra.mxu0 %v127
    %161 = vmatpush.msra.mxu0 %v126
    %162 = vmatmul.f32.gmra.mxu0 %v125
    %v163 = vpop.f32.mrf.mxu0
    %v164 = vadd.f32 %v144, %v163
    %165 = vdwg.mxu0
    %v166 = vmax.f32 %v164, 0.0
    %v167 = vld [vmem:[#allocation8] sm:$0xff]
    %v168 = vld [vmem:[#allocation8 + $0x8] sm:$0xff]
    %v169 = vld [vmem:[#allocation8 + $0x10] sm:$0xff]
    %v170 = vld [vmem:[#allocation8 + $0x18] sm:$0xff]
    %v171 = vld [vmem:[#allocation8 + $0x20] sm:$0xff]
    %v172 = vld [vmem:[#allocation8 + $0x28] sm:$0xff]
    %v173 = vld [vmem:[#allocation8 + $0x30] sm:$0xff]
    %v174 = vld [vmem:[#allocation8 + $0x38] sm:$0xff]
    %v175 = vld [vmem:[#allocation8 + $0x40] sm:$0xff]
    %v176 = vld [vmem:[#allocation8 + $0x48] sm:$0xff]
    %v177 = vld [vmem:[#allocation8 + $0x50] sm:$0xff]
    %v178 = vld [vmem:[#allocation8 + $0x58] sm:$0xff]
    %v179 = vld [vmem:[#allocation8 + $0x60] sm:$0xff]
    %v180 = vld [vmem:[#allocation8 + $0x68] sm:$0xff]
    %v181 = vld [vmem:[#allocation8 + $0x70] sm:$0xff]
    %v182 = vld [vmem:[#allocation8 + $0x78] sm:$0xff]
    %v183 = vld [vmem:[%s6] sm:$0x1]
    %v185 = vperm.slane %v183, 0
    %187 = vmatpush.msra.mxu0 %v182
    %188 = vmatpush.msra.mxu0 %v181
    %189 = vmatpush.msra.mxu0 %v180
    %190 = vmatpush.msra.mxu0 %v179
    %191 = vmatpush.msra.mxu0 %v178
    %192 = vmatpush.msra.mxu0 %v177
    %193 = vmatpush.msra.mxu0 %v176
    %194 = vmatpush.msra.mxu0 %v175
    %195 = vmatpush.msra.mxu0 %v174
    %196 = vmatpush.msra.mxu0 %v173
    %197 = vmatpush.msra.mxu0 %v172
    %198 = vmatpush.msra.mxu0 %v171
    %199 = vmatpush.msra.mxu0 %v170
    %200 = vmatpush.msra.mxu0 %v169
    %201 = vmatpush.msra.mxu0 %v168
    %202 = vmatpush.msra.mxu0 %v167
    %203 = vmatmul.f32.gmra.mxu0 %v166
    %v204 = vpop.f32.mrf.mxu0
    %v205 = vadd.f32 %v185, %v204
    %206 = vdwg.mxu0
    %v207 = vlaneseq
    %v208 = vand.u32 %v207, 127
    %vm209 = vcmp.lt.s32.totalorder %v208, 10
    %v210 = vsel %vm209, %v205, -1e+30
    %211 = vmax.xlane.f32.xlu0 %v210
    %v212 = vpop.xlane.xlu0 %211
    %v213 = vsub.f32 %v210, %v212
    %v214 = vmul.f32 %v213, 1.442695
    %v215 = vpow.pop %v214
    %216 = vadd.xlane.f32.xlu0 %v215
    %v217 = vpop.xlane.xlu0 %216
    %v218 = vlog2.pop %v217
    %v219 = vmul.f32 %v218, 0.6931472
    %v220 = vsub.f32 %v213, %v219
    %221 = vst [vmem:[#allocation10] sm:$0xff] %v220
    // Predicated region
    $region46: #{tpu_custom_call.1} parent=1 // pred_check
      _
    $region47: #{tpu_custom_call.1} parent=1 // pred_check_branch
      %223 = sbr.rel (0) target = $region49
    $region48: #{tpu_custom_call.1} parent=1 // pred_region
      %225 = vsyncadd [#allocation4], 0
      %s227 = sshll.u32 [#allocation10], 4
      %s228 = int_to_ptr.vmem [resolvable:$true] %s227
      %s229 = sshll.u32 %s7, 4
      %s230 = int_to_ptr.hbm [resolvable:$true] %s229
      %232 = dma.vmem_to_hbm [thread:$0]  %s228, 128, %s230, [#allocation4]
    $region49: #{tpu_custom_call.1} parent=1 // pred_fallthru
      _
    // Predicated region
    $region50: #{tpu_custom_call.1} parent=1 // pred_check
      _
    $region51: #{tpu_custom_call.1} parent=1 // pred_check_branch
      %234 = sbr.rel (0) target = $region53
    $region52: #{tpu_custom_call.1} parent=1 // pred_region
      %236 = dma.done [#allocation4], 128
    $region53: #{tpu_custom_call.1} parent=1 // pred_fallthru
      _
    %237 = vsyncpa [#allocation3], 1
    %238 = vsyncpa [#allocation6], 1
    %239 = vsyncpa [#allocation9], 1
    %240 = vsyncpa [#allocation4], 1

</llo_original>
